<compile_context>
chip_gen: v7x
topology: tpu7x:2x2x1
jax: 0.10.0
libtpu: 0.0.40
codegen_flags: <defaults>
</compile_context>

<pallas_src>
import functools

import jax
import jax.numpy as jnp
from jax.experimental import pallas as pl
from jax.experimental.pallas import tpu as pltpu


# ---------------------------------------------------------------------------
# Pallas kernel: fused standard_gcnn forward (all layers + classifier + sigmoid)
# ---------------------------------------------------------------------------
def fused_gcnn_kernel(s_ref, x_ref, w_ref, b_ref, fc_ref, out_ref, *,
                      n_layers, cmax, out_dim, fc_out, negative_slope):
    """Inputs (all fp32, fully resident in VMEM):
         s_ref  : (N, N)                normalized graph shift S
         x_ref  : (N, Cmax)             node features, zero-padded columns
         w_ref  : (n_layers, Cmax, Cmax) conv weights, zero-padded
         b_ref  : (n_layers, 1, Cmax)   conv biases, zero-padded
         fc_ref : (Cmax+1, fc_out)      rows 0..Cmax-1 = fc_W^T (zero-padded
                                        rows >= out_dim), row Cmax = fc_b
       Output:
         out_ref: (N, out_dim + 2*fc_out) = [embedding | pre_sigmoid | sigmoid]
    """
    S = s_ref[...]
    h = x_ref[...]                                   # (N, Cmax)

    for i in range(n_layers):                        # statically unrolled
        W = w_ref[i]                                 # (Cmax, Cmax)
        b = b_ref[i]                                 # (1, Cmax)
        sx = jnp.dot(S, h, preferred_element_type=jnp.float32)
        y = jnp.dot(sx, W, preferred_element_type=jnp.float32) + b
        if i < n_layers - 1:
            # nn.LeakyReLU (default slope 0.01); F.dropout(training=False)=id
            y = jnp.maximum(y, negative_slope * y)
        h = y                                        # padded cols stay == 0

    # classifier: emb @ fc_W^T + fc_b  (fc_W^T pre-transposed, zero-padded rows)
    fc_wt = fc_ref[:cmax, :]                         # (Cmax, fc_out)
    fc_b = fc_ref[cmax:, :]                          # (1, fc_out)
    pre = jnp.dot(h, fc_wt, preferred_element_type=jnp.float32) + fc_b
    sig = 0.5 * jnp.tanh(0.5 * pre) + 0.5            # sigmoid via EUP tanh

    # single lane-packed output slab: [embedding | pre_sigmoid | sigmoid]
    out_ref[:, :out_dim] = h[:, :out_dim].astype(out_ref.dtype)
    out_ref[:, out_dim:out_dim + fc_out] = pre.astype(out_ref.dtype)
    out_ref[:, out_dim + fc_out:] = sig.astype(out_ref.dtype)


def standard_gcnn_forward(x, S_norm, conv_params, fc_W, fc_b, negative_slope=0.01):
    """Full forward pass of standard_gcnn (eval mode) in ONE grid-less pallas_call."""
    f32 = jnp.float32
    N = x.shape[0]
    n_layers = len(conv_params)
    out_dim = conv_params[-1][0].shape[1]
    fc_out = fc_W.shape[0]

    # Common padded channel width (multiple of 8 for friendly sublane layout).
    dims = [conv_params[0][0].shape[0]] + [W.shape[1] for W, _ in conv_params]
    cmax = -(-max(dims) // 8) * 8

    # --- pack parameters into a few zero-padded slabs (wrapper-side, tiny) ---
    x_pad = jnp.zeros((N, cmax), f32).at[:, :x.shape[1]].set(x.astype(f32))
    w_stack = jnp.stack([
        jnp.zeros((cmax, cmax), f32).at[:W.shape[0], :W.shape[1]].set(W.astype(f32))
        for W, _ in conv_params])
    b_stack = jnp.stack([
        jnp.zeros((1, cmax), f32).at[0, :b.shape[0]].set(b.astype(f32))
        for _, b in conv_params])
    fc_pack = (jnp.zeros((cmax + 1, fc_out), f32)
               .at[:fc_W.shape[1], :].set(fc_W.T.astype(f32))     # pre-transposed
               .at[cmax, :].set(fc_b.astype(f32)))

    kern = functools.partial(
        fused_gcnn_kernel, n_layers=n_layers, cmax=cmax, out_dim=out_dim,
        fc_out=fc_out, negative_slope=negative_slope)

    vmem_spec = pl.BlockSpec(memory_space=pltpu.MemorySpace.VMEM)
    slab = pl.pallas_call(
        kern,
        in_specs=[vmem_spec] * 5,
        out_specs=vmem_spec,
        out_shape=jax.ShapeDtypeStruct((N, out_dim + 2 * fc_out), x.dtype),
    )(S_norm.astype(f32), x_pad, w_stack, b_stack, fc_pack)

    embedding = slab[:, :out_dim]
    pre_sigmoid = slab[:, out_dim:out_dim + fc_out]
    output = slab[:, out_dim + fc_out:]

    importance_pre_fc = embedding        # last conv output (pre-view == embedding)
    first_layer_weights = fc_W           # self.classifier[0].weight
    first_conv_W = conv_params[0][0]     # self.convs[0].W
    return output, importance_pre_fc, first_layer_weights, pre_sigmoid, first_conv_W, embedding


# ---------------------------------------------------------------------------
# Parameter construction (plain JAX glue, deterministic)
# ---------------------------------------------------------------------------
def normalize_S(S_raw):
    """S <- D^{-1/2} (S + I) D^{-1/2}, as in standard_gcnn_layer.__init__."""
    N = S_raw.shape[0]
    S = S_raw + jnp.eye(N, dtype=S_raw.dtype)
    d = S.sum(axis=1)
    D_inv = jnp.diag(1.0 / jnp.sqrt(d))
    return D_inv @ S @ D_inv


def init_gcn_layer_params(key, in_dim, out_dim):
    kw, kb = jax.random.split(key)
    # kaiming_uniform_ (leaky_relu gain sqrt(2), PyTorch fan_in = W.shape[1])
    fan_in = out_dim
    bound = jnp.sqrt(2.0) * jnp.sqrt(3.0 / fan_in)
    W = jax.random.uniform(kw, (in_dim, out_dim), jnp.float32, -bound, bound)
    std = 1.0 / (in_dim * out_dim)
    b = jax.random.uniform(kb, (out_dim,), jnp.float32, -std, std)
    return W, b


def init_linear_params(key, in_features, out_features):
    kw, kb = jax.random.split(key)
    bound = 1.0 / jnp.sqrt(in_features)
    W = jax.random.uniform(kw, (out_features, in_features), jnp.float32, -bound, bound)
    b = jax.random.uniform(kb, (out_features,), jnp.float32, -bound, bound)
    return W, b


# ---------------------------------------------------------------------------
# Reference (pure JAX) for correctness checking
# ---------------------------------------------------------------------------
def reference_forward(x, S_norm, conv_params, fc_W, fc_b):
    n_layers = len(conv_params)
    for i in range(n_layers - 1):
        W, b = conv_params[i]
        x = S_norm @ x @ W + b[None, :]
        x = jnp.where(x >= 0, x, 0.01 * x)
    W, b = conv_params[-1]
    x = S_norm @ x @ W + b[None, :]
    pre = x @ fc_W.T + fc_b[None, :]
    out = jax.nn.sigmoid(pre)
    return out, x, pre


if __name__ == "__main__":
    key = jax.random.PRNGKey(0)

    # Small shapes consistent with the module: N graph nodes, feature dims.
    N = 16          # number of nodes (S is N x N)
    in_dim = 8
    hid_dim = 32
    out_dim = 16
    n_layers = 3
    fc_layer = [(out_dim, 4)]   # classifier: Linear(out_dim -> 4)

    k_s, k_x, k_p, k_fc = jax.random.split(key, 4)

    # Random symmetric 0/1 adjacency (no self loops; +I is added in normalize_S)
    A = (jax.random.uniform(k_s, (N, N)) < 0.3).astype(jnp.float32)
    A = jnp.maximum(A, A.T)
    A = A * (1.0 - jnp.eye(N, dtype=jnp.float32))
    S_norm = normalize_S(A)

    # Node features x: [N, in_dim]
    x = jax.random.normal(k_x, (N, in_dim), jnp.float32)

    # GCN layer parameters: in_dim -> hid_dim -> ... -> out_dim
    dims = [in_dim] + [hid_dim] * (n_layers - 1) + [out_dim]
    conv_params = []
    pkeys = jax.random.split(k_p, n_layers)
    for i in range(n_layers):
        conv_params.append(init_gcn_layer_params(pkeys[i], dims[i], dims[i + 1]))

    # Classifier Linear(fc_layer[0][0] -> fc_layer[0][1])
    fc_W, fc_b = init_linear_params(k_fc, fc_layer[0][0], fc_layer[0][1])

    # Run fused Pallas forward
    outs = standard_gcnn_forward(x, S_norm, conv_params, fc_W, fc_b)
    outs = jax.block_until_ready(outs)
    output, importance_pre_fc, first_layer_weights, pre_sigmoid, first_conv_W, embedding = outs

    # Check against pure-JAX reference
    ref_out, ref_emb, ref_pre = reference_forward(x, S_norm, conv_params, fc_W, fc_b)
    assert jnp.allclose(output, ref_out, atol=1e-5, rtol=1e-5)
    assert jnp.allclose(embedding, ref_emb, atol=1e-5, rtol=1e-5)
    assert jnp.allclose(pre_sigmoid, ref_pre, atol=1e-5, rtol=1e-5)
    assert jnp.allclose(importance_pre_fc, ref_emb, atol=1e-5, rtol=1e-5)
    assert importance_pre_fc.shape == (N, out_dim)
    assert output.shape == (N, fc_layer[0][1])

    print("KERNEL_OK")
</pallas_src>

<mosaic_0001>
module attributes {stable_mosaic.version = 11 : i64} {
  func.func @fused_gcnn_kernel(%arg0: memref<16x16xf32, #tpu.memory_space<vmem>>, %arg1: memref<16x32xf32, #tpu.memory_space<vmem>>, %arg2: memref<3x32x32xf32, #tpu.memory_space<vmem>>, %arg3: memref<3x1x32xf32, #tpu.memory_space<vmem>>, %arg4: memref<33x4xf32, #tpu.memory_space<vmem>>, %arg5: memref<16x24xf32, #tpu.memory_space<vmem>>) attributes {dimension_semantics = [], scalar_prefetch = 0 : i64, scratch_operands = 0 : i64, tpu.core_type = #tpu.core_type<tc>} {
    %c0 = arith.constant 0 : index
    %c0_0 = arith.constant 0 : index
    %0 = vector.load %arg0[%c0, %c0_0] : memref<16x16xf32, #tpu.memory_space<vmem>>, vector<16x16xf32>
    %c0_1 = arith.constant 0 : index
    %c0_2 = arith.constant 0 : index
    %1 = vector.load %arg1[%c0_1, %c0_2] : memref<16x32xf32, #tpu.memory_space<vmem>>, vector<16x32xf32>
    %c0_3 = arith.constant 0 : index
    %c0_4 = arith.constant 0 : index
    %c0_5 = arith.constant 0 : index
    %2 = vector.load %arg2[%c0_3, %c0_4, %c0_5] : memref<3x32x32xf32, #tpu.memory_space<vmem>>, vector<1x32x32xf32>
    %3 = vector.shape_cast %2 : vector<1x32x32xf32> to vector<32x32xf32>
    %c0_6 = arith.constant 0 : index
    %c0_7 = arith.constant 0 : index
    %c0_8 = arith.constant 0 : index
    %4 = vector.load %arg3[%c0_6, %c0_7, %c0_8] : memref<3x1x32xf32, #tpu.memory_space<vmem>>, vector<1x1x32xf32>
    %5 = vector.shape_cast %4 : vector<1x1x32xf32> to vector<1x32xf32>
    %cst = arith.constant dense<0.000000e+00> : vector<16x32xf32>
    %6 = tpu.matmul %0, %1, %cst {dimension_numbers = #tpu.dot_dimension_numbers<[1], [0], [0], [1], [0, 0, 1, 1], [], []>} : vector<16x16xf32>, vector<16x32xf32>, vector<16x32xf32> -> vector<16x32xf32>
    %cst_9 = arith.constant dense<0.000000e+00> : vector<16x32xf32>
    %7 = tpu.matmul %6, %3, %cst_9 {dimension_numbers = #tpu.dot_dimension_numbers<[1], [0], [0], [1], [0, 0, 1, 1], [], []>} : vector<16x32xf32>, vector<32x32xf32>, vector<16x32xf32> -> vector<16x32xf32>
    %8 = vector.broadcast %5 : vector<1x32xf32> to vector<16x32xf32>
    %9 = arith.addf %7, %8 : vector<16x32xf32>
    %cst_10 = arith.constant 0.00999999977 : f32
    %10 = vector.broadcast %cst_10 : f32 to vector<16x32xf32>
    %11 = arith.mulf %10, %9 : vector<16x32xf32>
    %12 = arith.maximumf %9, %11 : vector<16x32xf32>
    %c1 = arith.constant 1 : index
    %c0_11 = arith.constant 0 : index
    %c0_12 = arith.constant 0 : index
    %13 = vector.load %arg2[%c1, %c0_11, %c0_12] : memref<3x32x32xf32, #tpu.memory_space<vmem>>, vector<1x32x32xf32>
    %14 = vector.shape_cast %13 : vector<1x32x32xf32> to vector<32x32xf32>
    %c1_13 = arith.constant 1 : index
    %c0_14 = arith.constant 0 : index
    %c0_15 = arith.constant 0 : index
    %15 = vector.load %arg3[%c1_13, %c0_14, %c0_15] : memref<3x1x32xf32, #tpu.memory_space<vmem>>, vector<1x1x32xf32>
    %16 = vector.shape_cast %15 : vector<1x1x32xf32> to vector<1x32xf32>
    %cst_16 = arith.constant dense<0.000000e+00> : vector<16x32xf32>
    %17 = tpu.matmul %0, %12, %cst_16 {dimension_numbers = #tpu.dot_dimension_numbers<[1], [0], [0], [1], [0, 0, 1, 1], [], []>} : vector<16x16xf32>, vector<16x32xf32>, vector<16x32xf32> -> vector<16x32xf32>
    %cst_17 = arith.constant dense<0.000000e+00> : vector<16x32xf32>
    %18 = tpu.matmul %17, %14, %cst_17 {dimension_numbers = #tpu.dot_dimension_numbers<[1], [0], [0], [1], [0, 0, 1, 1], [], []>} : vector<16x32xf32>, vector<32x32xf32>, vector<16x32xf32> -> vector<16x32xf32>
    %19 = vector.broadcast %16 : vector<1x32xf32> to vector<16x32xf32>
    %20 = arith.addf %18, %19 : vector<16x32xf32>
    %cst_18 = arith.constant 0.00999999977 : f32
    %21 = vector.broadcast %cst_18 : f32 to vector<16x32xf32>
    %22 = arith.mulf %21, %20 : vector<16x32xf32>
    %23 = arith.maximumf %20, %22 : vector<16x32xf32>
    %c2 = arith.constant 2 : index
    %c0_19 = arith.constant 0 : index
    %c0_20 = arith.constant 0 : index
    %24 = vector.load %arg2[%c2, %c0_19, %c0_20] : memref<3x32x32xf32, #tpu.memory_space<vmem>>, vector<1x32x32xf32>
    %25 = vector.shape_cast %24 : vector<1x32x32xf32> to vector<32x32xf32>
    %c2_21 = arith.constant 2 : index
    %c0_22 = arith.constant 0 : index
    %c0_23 = arith.constant 0 : index
    %26 = vector.load %arg3[%c2_21, %c0_22, %c0_23] : memref<3x1x32xf32, #tpu.memory_space<vmem>>, vector<1x1x32xf32>
    %27 = vector.shape_cast %26 : vector<1x1x32xf32> to vector<1x32xf32>
    %cst_24 = arith.constant dense<0.000000e+00> : vector<16x32xf32>
    %28 = tpu.matmul %0, %23, %cst_24 {dimension_numbers = #tpu.dot_dimension_numbers<[1], [0], [0], [1], [0, 0, 1, 1], [], []>} : vector<16x16xf32>, vector<16x32xf32>, vector<16x32xf32> -> vector<16x32xf32>
    %cst_25 = arith.constant dense<0.000000e+00> : vector<16x32xf32>
    %29 = tpu.matmul %28, %25, %cst_25 {dimension_numbers = #tpu.dot_dimension_numbers<[1], [0], [0], [1], [0, 0, 1, 1], [], []>} : vector<16x32xf32>, vector<32x32xf32>, vector<16x32xf32> -> vector<16x32xf32>
    %30 = vector.broadcast %27 : vector<1x32xf32> to vector<16x32xf32>
    %31 = arith.addf %29, %30 : vector<16x32xf32>
    %c0_26 = arith.constant 0 : index
    %c0_27 = arith.constant 0 : index
    %32 = vector.load %arg4[%c0_26, %c0_27] : memref<33x4xf32, #tpu.memory_space<vmem>>, vector<32x4xf32>
    %c32 = arith.constant 32 : index
    %c0_28 = arith.constant 0 : index
    %33 = vector.load %arg4[%c32, %c0_28] : memref<33x4xf32, #tpu.memory_space<vmem>>, vector<1x4xf32>
    %cst_29 = arith.constant dense<0.000000e+00> : vector<16x4xf32>
    %34 = tpu.matmul %31, %32, %cst_29 {dimension_numbers = #tpu.dot_dimension_numbers<[1], [0], [0], [1], [0, 0, 1, 1], [], []>} : vector<16x32xf32>, vector<32x4xf32>, vector<16x4xf32> -> vector<16x4xf32>
    %35 = vector.broadcast %33 : vector<1x4xf32> to vector<16x4xf32>
    %36 = arith.addf %34, %35 : vector<16x4xf32>
    %cst_30 = arith.constant 5.000000e-01 : f32
    %37 = vector.broadcast %cst_30 : f32 to vector<16x4xf32>
    %38 = arith.mulf %37, %36 : vector<16x4xf32>
    %39 = math.tanh %38 : vector<16x4xf32>
    %cst_31 = arith.constant 5.000000e-01 : f32
    %40 = vector.broadcast %cst_31 : f32 to vector<16x4xf32>
    %41 = arith.mulf %40, %39 : vector<16x4xf32>
    %cst_32 = arith.constant 5.000000e-01 : f32
    %42 = vector.broadcast %cst_32 : f32 to vector<16x4xf32>
    %43 = arith.addf %41, %42 : vector<16x4xf32>
    %44 = vector.extract_strided_slice %31 {offsets = [0, 0], sizes = [16, 16], strides = [1, 1]} : vector<16x32xf32> to vector<16x16xf32>
    %c0_33 = arith.constant 0 : index
    %c0_34 = arith.constant 0 : index
    %45 = vector.load %arg5[%c0_33, %c0_34] : memref<16x24xf32, #tpu.memory_space<vmem>>, vector<16x16xf32>
    tpu.vector_store %arg5[%c0_33, %c0_34], %44 {strides = array<i32>} : memref<16x24xf32, #tpu.memory_space<vmem>>, vector<16x16xf32>,
    %c0_35 = arith.constant 0 : index
    %c16 = arith.constant 16 : index
    %46 = vector.load %arg5[%c0_35, %c16] : memref<16x24xf32, #tpu.memory_space<vmem>>, vector<16x4xf32>
    tpu.vector_store %arg5[%c0_35, %c16], %36 {strides = array<i32>} : memref<16x24xf32, #tpu.memory_space<vmem>>, vector<16x4xf32>,
    %c0_36 = arith.constant 0 : index
    %c20 = arith.constant 20 : index
    %47 = vector.load %arg5[%c0_36, %c20] : memref<16x24xf32, #tpu.memory_space<vmem>>, vector<16x4xf32>
    tpu.vector_store %arg5[%c0_36, %c20], %43 {strides = array<i32>} : memref<16x24xf32, #tpu.memory_space<vmem>>, vector<16x4xf32>,
    return
  }
}

</mosaic_0001>

<llo_original>
// kernel: tpu_custom_call.1
$region0: #{tpu_custom_call.1}
  #allocation0 [shape = 'u32[]', space=smem, size = 0x4, offset = 0x4, fixed_abs, tag = 'smem constant byte address 0x4 - core index']
  #allocation1 [shape = 'u32[144,128]{1,0:T(1,128)}', space=vmem, size = 0x12000, scoped, tag = 'internal scratch']
  %s0 = inlined_call_operand.vmem [shape: f32[16,16], index: 0, kind: input, shape index: {}]
  %s1 = inlined_call_operand.vmem [shape: f32[16,32], index: 1, kind: input, shape index: {}]
  %s2 = inlined_call_operand.hbm [shape: f32[3,32,32], index: 2, kind: input, shape index: {}]
  %s3 = inlined_call_operand.vmem [shape: f32[3,1,32], index: 3, kind: input, shape index: {}]
  %s4 = inlined_call_operand.vmem [shape: f32[33,4], index: 4, kind: input, shape index: {}]
  %s5 = inlined_call_operand.hbm [shape: f32[16,24], index: 5, kind: output, shape index: {}]
  %s6 = sld [smem:[#allocation0]]
  $region34: #{tpu_custom_call.1} parent=0
    _
  %s8 = ssub.s32 1, %s6
  %s9 = scalar_select 0, %s8, %s6
  $region1: #{tpu_custom_call.1} parent=0
    #allocation2 [shape = 'u8[49152]{0}', space=vmem, size = 0xc000, scoped, tag = 'input window, operand 2, single buffered']
    #allocation3 [shape = 's32[1]{0}', space=sflag, size = 0x4, scoped, tag = 'scoped memory for tpu_custom_call.1']
    #allocation4 [shape = 's32[1]{0}', space=sflag, size = 0x4, scoped, tag = 'scoped memory for tpu_custom_call.1']
    #allocation5 [shape = 'u8[8192]{0}', space=vmem, size = 0x2000, scoped, tag = 'output window, operand 0, single buffered']
    %10 = vsyncpa [#allocation3], 0
    %11 = vsyncpa [#allocation4], 0
    // Predicated region
    $region2: #{tpu_custom_call.1} parent=1 // pred_check
      _
    $region3: #{tpu_custom_call.1} parent=1 // pred_check_branch
      %13 = sbr.rel (0) target = $region5
    $region4: #{tpu_custom_call.1} parent=1 // pred_region
      _
    $region5: #{tpu_custom_call.1} parent=1 // pred_fallthru
      _
    // Predicated region
    $region6: #{tpu_custom_call.1} parent=1 // pred_check
      _
    $region7: #{tpu_custom_call.1} parent=1 // pred_check_branch
      %15 = sbr.rel (0) target = $region9
    $region8: #{tpu_custom_call.1} parent=1 // pred_region
      _
    $region9: #{tpu_custom_call.1} parent=1 // pred_fallthru
      _
    // Predicated region
    $region10: #{tpu_custom_call.1} parent=1 // pred_check
      _
    $region11: #{tpu_custom_call.1} parent=1 // pred_check_branch
      %17 = sbr.rel (0) target = $region13
    $region12: #{tpu_custom_call.1} parent=1 // pred_region
      %s19 = ssub.s32 1536, 1536
      %20 = vsyncadd [#allocation3], %s19
      %s21 = sshll.u32 [#allocation2], 4
      %s22 = int_to_ptr.vmem [resolvable:$true] %s21
      %27 = dma.hbm_to_vmem [thread:$0]  %s2, 1536, %s22, [#allocation3], 128, 128, 8
    $region13: #{tpu_custom_call.1} parent=1 // pred_fallthru
      _
    // Predicated region
    $region14: #{tpu_custom_call.1} parent=1 // pred_check
      _
    $region15: #{tpu_custom_call.1} parent=1 // pred_check_branch
      %29 = sbr.rel (0) target = $region17
    $region16: #{tpu_custom_call.1} parent=1 // pred_region
      _
    $region17: #{tpu_custom_call.1} parent=1 // pred_fallthru
      _
    // Predicated region
    $region18: #{tpu_custom_call.1} parent=1 // pred_check
      _
    $region19: #{tpu_custom_call.1} parent=1 // pred_check_branch
      %31 = sbr.rel (0) target = $region21
    $region20: #{tpu_custom_call.1} parent=1 // pred_region
      _
    $region21: #{tpu_custom_call.1} parent=1 // pred_fallthru
      _
    // Predicated region
    $region22: #{tpu_custom_call.1} parent=1 // pred_check
      _
    $region23: #{tpu_custom_call.1} parent=1 // pred_check_branch
      %33 = sbr.rel (0) target = $region25
    $region24: #{tpu_custom_call.1} parent=1 // pred_region
      %34 = dma.done [#allocation3], 1536
    $region25: #{tpu_custom_call.1} parent=1 // pred_fallthru
      _
    %v35 = vld [vmem:[%s0] sm:$0xff]
    %v36 = vld [vmem:[%s0 + $0x8] sm:$0xff]
    %v37 = vld [vmem:[%s1] sm:$0xff]
    %v38 = vld [vmem:[%s1 + $0x8] sm:$0xff]
    %v39 = vld [vmem:[#allocation2] sm:$0xff]
    %v40 = vld [vmem:[#allocation2 + $0x8] sm:$0xff]
    %v41 = vld [vmem:[#allocation2 + $0x10] sm:$0xff]
    %v42 = vld [vmem:[#allocation2 + $0x18] sm:$0xff]
    %v43 = vld [vmem:[%s3] sm:$0x1]
    %vm44 = vcmask 130048
    %v46 = vsel %vm44, %v35, 0
    %v49 = vsel %vm44, %v36, 0
    %51 = vmatprep.subr.mxu0 0.0
    %52 = vmatpush1.msra.mxu0 %v37
    %53 = vmatprep.subr.mxu0 0.0
    %54 = vmatpush1.msra.mxu0 %v38
    %55 = vmatprep.subr.mxu0 0.0
    %56 = vmatpush1.msra.mxu0 0.0
    %57 = vmatprep.subr.mxu0 0.0
    %58 = vmatpush1.msra.mxu0 0.0
    %59 = vmatprep.subr.mxu0 0.0
    %60 = vmatpush1.msra.mxu0 0.0
    %61 = vmatprep.subr.mxu0 0.0
    %62 = vmatpush1.msra.mxu0 0.0
    %63 = vmatprep.subr.mxu0 0.0
    %64 = vmatpush1.msra.mxu0 0.0
    %65 = vmatprep.subr.mxu0 0.0
    %66 = vmatpush1.msra.mxu0 0.0
    %67 = vmatprep.subr.mxu0 0.0
    %68 = vmatpush1.msra.mxu0 0.0
    %69 = vmatprep.subr.mxu0 0.0
    %70 = vmatpush1.msra.mxu0 0.0
    %71 = vmatprep.subr.mxu0 0.0
    %72 = vmatpush1.msra.mxu0 0.0
    %73 = vmatprep.subr.mxu0 0.0
    %74 = vmatpush1.msra.mxu0 0.0
    %75 = vmatprep.subr.mxu0 0.0
    %76 = vmatpush1.msra.mxu0 0.0
    %77 = vmatprep.subr.mxu0 0.0
    %78 = vmatpush1.msra.mxu0 0.0
    %79 = vmatprep.subr.mxu0 0.0
    %80 = vmatpush1.msra.mxu0 0.0
    %81 = vmatprep.subr.mxu0 0.0
    %82 = vmatpush1.msra.mxu0 0.0
    %83 = vmatprep.subr.mxu0 0.0
    %84 = vmatpush1.msra.mxu0 0.0
    %85 = vmatprep.subr.mxu0 0.0
    %86 = vmatpush1.msra.mxu0 0.0
    %87 = vmatprep.subr.mxu0 0.0
    %88 = vmatpush1.msra.mxu0 0.0
    %89 = vmatprep.subr.mxu0 0.0
    %90 = vmatpush1.msra.mxu0 0.0
    %91 = vmatprep.subr.mxu0 0.0
    %92 = vmatpush1.msra.mxu0 0.0
    %93 = vmatprep.subr.mxu0 0.0
    %94 = vmatpush1.msra.mxu0 0.0
    %95 = vmatprep.subr.mxu0 0.0
    %96 = vmatpush1.msra.mxu0 0.0
    %97 = vmatprep.subr.mxu0 0.0
    %98 = vmatpush1.msra.mxu0 0.0
    %99 = vmatprep.subr.mxu0 0.0
    %100 = vmatpush1.msra.mxu0 0.0
    %101 = vmatprep.subr.mxu0 0.0
    %102 = vmatpush1.msra.mxu0 0.0
    %103 = vmatprep.subr.mxu0 0.0
    %104 = vmatpush1.msra.mxu0 0.0
    %105 = vmatprep.subr.mxu0 0.0
    %106 = vmatpush1.msra.mxu0 0.0
    %107 = vmatprep.subr.mxu0 0.0
    %108 = vmatpush1.msra.mxu0 0.0
    %109 = vmatprep.subr.mxu0 0.0
    %110 = vmatpush1.msra.mxu0 0.0
    %111 = vmatprep.subr.mxu0 0.0
    %112 = vmatpush1.msra.mxu0 0.0
    %113 = vmatprep.subr.mxu0 0.0
    %114 = vmatpush1.msra.mxu0 0.0
    %115 = vmatprep.mubr.f32.mxu0 0.0
    %116 = vmatmul.mubr.f32.gmra.mrb[0].mxu0 %v46
    %v117 = vpop.f32.mrb[0].mxu0
    %v118 = vadd.f32 0.0, %v117
    %v119 = vpop.f32.mrb[0].mxu0
    %120 = vmatprep.mubr.f32.mxu0 0.0
    %121 = vmatmul.mubr.f32.gmra.mrb[0].mxu0 %v49
    %v122 = vpop.f32.mrb[0].mxu0
    %v123 = vadd.f32 0.0, %v122
    %v124 = vpop.f32.mrb[0].mxu0
    %125 = vdwg.mxu0
    %v127 = vlaneseq
    %v128 = vshrl.u32 %v127, 7
    %v129 = vsub.s32 0, %v128
    %v130 = vrot.slane %v43, %v129
    %vm132 = vcmask 261120
    %v134 = vsel %vm132, %v118, 0
    %v137 = vsel %vm132, %v123, 0
    %139 = vmatprep.subr.mxu0 0.0
    %140 = vmatpush1.msra.mxu0 %v39
    %141 = vmatprep.subr.mxu0 0.0
    %142 = vmatpush1.msra.mxu0 %v40
    %143 = vmatprep.subr.mxu0 0.0
    %144 = vmatpush1.msra.mxu0 %v41
    %145 = vmatprep.subr.mxu0 0.0
    %146 = vmatpush1.msra.mxu0 %v42
    %147 = vmatprep.subr.mxu0 0.0
    %148 = vmatpush1.msra.mxu0 0.0
    %149 = vmatprep.subr.mxu0 0.0
    %150 = vmatpush1.msra.mxu0 0.0
    %151 = vmatprep.subr.mxu0 0.0
    %152 = vmatpush1.msra.mxu0 0.0
    %153 = vmatprep.subr.mxu0 0.0
    %154 = vmatpush1.msra.mxu0 0.0
    %155 = vmatprep.subr.mxu0 0.0
    %156 = vmatpush1.msra.mxu0 0.0
    %157 = vmatprep.subr.mxu0 0.0
    %158 = vmatpush1.msra.mxu0 0.0
    %159 = vmatprep.subr.mxu0 0.0
    %160 = vmatpush1.msra.mxu0 0.0
    %161 = vmatprep.subr.mxu0 0.0
    %162 = vmatpush1.msra.mxu0 0.0
    %163 = vmatprep.subr.mxu0 0.0
    %164 = vmatpush1.msra.mxu0 0.0
    %165 = vmatprep.subr.mxu0 0.0
    %166 = vmatpush1.msra.mxu0 0.0
    %167 = vmatprep.subr.mxu0 0.0
    %168 = vmatpush1.msra.mxu0 0.0
    %169 = vmatprep.subr.mxu0 0.0
    %170 = vmatpush1.msra.mxu0 0.0
    %171 = vmatprep.subr.mxu0 0.0
    %172 = vmatpush1.msra.mxu0 0.0
    %173 = vmatprep.subr.mxu0 0.0
    %174 = vmatpush1.msra.mxu0 0.0
    %175 = vmatprep.subr.mxu0 0.0
    %176 = vmatpush1.msra.mxu0 0.0
    %177 = vmatprep.subr.mxu0 0.0
    %178 = vmatpush1.msra.mxu0 0.0
    %179 = vmatprep.subr.mxu0 0.0
    %180 = vmatpush1.msra.mxu0 0.0
    %181 = vmatprep.subr.mxu0 0.0
    %182 = vmatpush1.msra.mxu0 0.0
    %183 = vmatprep.subr.mxu0 0.0
    %184 = vmatpush1.msra.mxu0 0.0
    %185 = vmatprep.subr.mxu0 0.0
    %186 = vmatpush1.msra.mxu0 0.0
    %187 = vmatprep.subr.mxu0 0.0
    %188 = vmatpush1.msra.mxu0 0.0
    %189 = vmatprep.subr.mxu0 0.0
    %190 = vmatpush1.msra.mxu0 0.0
    %191 = vmatprep.subr.mxu0 0.0
    %192 = vmatpush1.msra.mxu0 0.0
    %193 = vmatprep.subr.mxu0 0.0
    %194 = vmatpush1.msra.mxu0 0.0
    %195 = vmatprep.subr.mxu0 0.0
    %196 = vmatpush1.msra.mxu0 0.0
    %197 = vmatprep.subr.mxu0 0.0
    %198 = vmatpush1.msra.mxu0 0.0
    %199 = vmatprep.subr.mxu0 0.0
    %200 = vmatpush1.msra.mxu0 0.0
    %201 = vmatprep.subr.mxu0 0.0
    %202 = vmatpush1.msra.mxu0 0.0
    %203 = vmatprep.mubr.f32.mxu0 0.0
    %204 = vmatmul.mubr.f32.gmra.mrb[0].mxu0 %v134
    %v205 = vpop.f32.mrb[0].mxu0
    %v206 = vadd.f32 %v130, %v205
    %v207 = vpop.f32.mrb[0].mxu0
    %208 = vmatprep.mubr.f32.mxu0 0.0
    %209 = vmatmul.mubr.f32.gmra.mrb[0].mxu0 %v137
    %v210 = vpop.f32.mrb[0].mxu0
    %v211 = vadd.f32 %v130, %v210
    %v212 = vpop.f32.mrb[0].mxu0
    %213 = vdwg.mxu0
    %v214 = vmul.f32 %v206, 0.01
    %v215 = vmul.f32 %v211, 0.01
    %v216 = vmax.f32 %v206, %v214
    %v217 = vmax.f32 %v211, %v215
    %s218 = scalar_lea.vmem [#allocation2], 32
    %v219 = vld [vmem:[%s218] sm:$0xff]
    %v220 = vld [vmem:[%s218 + $0x8] sm:$0xff]
    %v221 = vld [vmem:[%s218 + $0x10] sm:$0xff]
    %v222 = vld [vmem:[%s218 + $0x18] sm:$0xff]
    %s223 = scalar_lea.vmem %s3, 1
    %v224 = vld [vmem:[%s223] sm:$0x1]
    %225 = vmatprep.subr.mxu0 0.0
    %226 = vmatpush1.msra.mxu0 %v216
    %227 = vmatprep.subr.mxu0 0.0
    %228 = vmatpush1.msra.mxu0 %v217
    %229 = vmatprep.subr.mxu0 0.0
    %230 = vmatpush1.msra.mxu0 0.0
    %231 = vmatprep.subr.mxu0 0.0
    %232 = vmatpush1.msra.mxu0 0.0
    %233 = vmatprep.subr.mxu0 0.0
    %234 = vmatpush1.msra.mxu0 0.0
    %235 = vmatprep.subr.mxu0 0.0
    %236 = vmatpush1.msra.mxu0 0.0
    %237 = vmatprep.subr.mxu0 0.0
    %238 = vmatpush1.msra.mxu0 0.0
    %239 = vmatprep.subr.mxu0 0.0
    %240 = vmatpush1.msra.mxu0 0.0
    %241 = vmatprep.subr.mxu0 0.0
    %242 = vmatpush1.msra.mxu0 0.0
    %243 = vmatprep.subr.mxu0 0.0
    %244 = vmatpush1.msra.mxu0 0.0
    %245 = vmatprep.subr.mxu0 0.0
    %246 = vmatpush1.msra.mxu0 0.0
    %247 = vmatprep.subr.mxu0 0.0
    %248 = vmatpush1.msra.mxu0 0.0
    %249 = vmatprep.subr.mxu0 0.0
    %250 = vmatpush1.msra.mxu0 0.0
    %251 = vmatprep.subr.mxu0 0.0
    %252 = vmatpush1.msra.mxu0 0.0
    %253 = vmatprep.subr.mxu0 0.0
    %254 = vmatpush1.msra.mxu0 0.0
    %255 = vmatprep.subr.mxu0 0.0
    %256 = vmatpush1.msra.mxu0 0.0
    %257 = vmatprep.subr.mxu0 0.0
    %258 = vmatpush1.msra.mxu0 0.0
    %259 = vmatprep.subr.mxu0 0.0
    %260 = vmatpush1.msra.mxu0 0.0
    %261 = vmatprep.subr.mxu0 0.0
    %262 = vmatpush1.msra.mxu0 0.0
    %263 = vmatprep.subr.mxu0 0.0
    %264 = vmatpush1.msra.mxu0 0.0
    %265 = vmatprep.subr.mxu0 0.0
    %266 = vmatpush1.msra.mxu0 0.0
    %267 = vmatprep.subr.mxu0 0.0
    %268 = vmatpush1.msra.mxu0 0.0
    %269 = vmatprep.subr.mxu0 0.0
    %270 = vmatpush1.msra.mxu0 0.0
    %271 = vmatprep.subr.mxu0 0.0
    %272 = vmatpush1.msra.mxu0 0.0
    %273 = vmatprep.subr.mxu0 0.0
    %274 = vmatpush1.msra.mxu0 0.0
    %275 = vmatprep.subr.mxu0 0.0
    %276 = vmatpush1.msra.mxu0 0.0
    %277 = vmatprep.subr.mxu0 0.0
    %278 = vmatpush1.msra.mxu0 0.0
    %279 = vmatprep.subr.mxu0 0.0
    %280 = vmatpush1.msra.mxu0 0.0
    %281 = vmatprep.subr.mxu0 0.0
    %282 = vmatpush1.msra.mxu0 0.0
    %283 = vmatprep.subr.mxu0 0.0
    %284 = vmatpush1.msra.mxu0 0.0
    %285 = vmatprep.subr.mxu0 0.0
    %286 = vmatpush1.msra.mxu0 0.0
    %287 = vmatprep.subr.mxu0 0.0
    %288 = vmatpush1.msra.mxu0 0.0
    %289 = vmatprep.mubr.f32.mxu0 0.0
    %290 = vmatmul.mubr.f32.gmra.mrb[0].mxu0 %v46
    %v291 = vpop.f32.mrb[0].mxu0
    %v292 = vadd.f32 0.0, %v291
    %v293 = vpop.f32.mrb[0].mxu0
    %294 = vmatprep.mubr.f32.mxu0 0.0
    %295 = vmatmul.mubr.f32.gmra.mrb[0].mxu0 %v49
    %v296 = vpop.f32.mrb[0].mxu0
    %v297 = vadd.f32 0.0, %v296
    %v298 = vpop.f32.mrb[0].mxu0
    %299 = vdwg.mxu0
    %v301 = vlaneseq
    %v302 = vshrl.u32 %v301, 7
    %v303 = vsub.s32 0, %v302
    %v304 = vrot.slane %v224, %v303
    %v307 = vsel %vm132, %v292, 0
    %v310 = vsel %vm132, %v297, 0
    %312 = vmatprep.subr.mxu0 0.0
    %313 = vmatpush1.msra.mxu0 %v219
    %314 = vmatprep.subr.mxu0 0.0
    %315 = vmatpush1.msra.mxu0 %v220
    %316 = vmatprep.subr.mxu0 0.0
    %317 = vmatpush1.msra.mxu0 %v221
    %318 = vmatprep.subr.mxu0 0.0
    %319 = vmatpush1.msra.mxu0 %v222
    %320 = vmatprep.subr.mxu0 0.0
    %321 = vmatpush1.msra.mxu0 0.0
    %322 = vmatprep.subr.mxu0 0.0
    %323 = vmatpush1.msra.mxu0 0.0
    %324 = vmatprep.subr.mxu0 0.0
    %325 = vmatpush1.msra.mxu0 0.0
    %326 = vmatprep.subr.mxu0 0.0
    %327 = vmatpush1.msra.mxu0 0.0
    %328 = vmatprep.subr.mxu0 0.0
    %329 = vmatpush1.msra.mxu0 0.0
    %330 = vmatprep.subr.mxu0 0.0
    %331 = vmatpush1.msra.mxu0 0.0
    %332 = vmatprep.subr.mxu0 0.0
    %333 = vmatpush1.msra.mxu0 0.0
    %334 = vmatprep.subr.mxu0 0.0
    %335 = vmatpush1.msra.mxu0 0.0
    %336 = vmatprep.subr.mxu0 0.0
    %337 = vmatpush1.msra.mxu0 0.0
    %338 = vmatprep.subr.mxu0 0.0
    %339 = vmatpush1.msra.mxu0 0.0
    %340 = vmatprep.subr.mxu0 0.0
    %341 = vmatpush1.msra.mxu0 0.0
    %342 = vmatprep.subr.mxu0 0.0
    %343 = vmatpush1.msra.mxu0 0.0
    %344 = vmatprep.subr.mxu0 0.0
    %345 = vmatpush1.msra.mxu0 0.0
    %346 = vmatprep.subr.mxu0 0.0
    %347 = vmatpush1.msra.mxu0 0.0
    %348 = vmatprep.subr.mxu0 0.0
    %349 = vmatpush1.msra.mxu0 0.0
    %350 = vmatprep.subr.mxu0 0.0
    %351 = vmatpush1.msra.mxu0 0.0
    %352 = vmatprep.subr.mxu0 0.0
    %353 = vmatpush1.msra.mxu0 0.0
    %354 = vmatprep.subr.mxu0 0.0
    %355 = vmatpush1.msra.mxu0 0.0
    %356 = vmatprep.subr.mxu0 0.0
    %357 = vmatpush1.msra.mxu0 0.0
    %358 = vmatprep.subr.mxu0 0.0
    %359 = vmatpush1.msra.mxu0 0.0
    %360 = vmatprep.subr.mxu0 0.0
    %361 = vmatpush1.msra.mxu0 0.0
    %362 = vmatprep.subr.mxu0 0.0
    %363 = vmatpush1.msra.mxu0 0.0
    %364 = vmatprep.subr.mxu0 0.0
    %365 = vmatpush1.msra.mxu0 0.0
    %366 = vmatprep.subr.mxu0 0.0
    %367 = vmatpush1.msra.mxu0 0.0
    %368 = vmatprep.subr.mxu0 0.0
    %369 = vmatpush1.msra.mxu0 0.0
    %370 = vmatprep.subr.mxu0 0.0
    %371 = vmatpush1.msra.mxu0 0.0
    %372 = vmatprep.subr.mxu0 0.0
    %373 = vmatpush1.msra.mxu0 0.0
    %374 = vmatprep.subr.mxu0 0.0
    %375 = vmatpush1.msra.mxu0 0.0
    %376 = vmatprep.mubr.f32.mxu0 0.0
    %377 = vmatmul.mubr.f32.gmra.mrb[0].mxu0 %v307
    %v378 = vpop.f32.mrb[0].mxu0
    %v379 = vadd.f32 %v304, %v378
    %v380 = vpop.f32.mrb[0].mxu0
    %381 = vmatprep.mubr.f32.mxu0 0.0
    %382 = vmatmul.mubr.f32.gmra.mrb[0].mxu0 %v310
    %v383 = vpop.f32.mrb[0].mxu0
    %v384 = vadd.f32 %v304, %v383
    %v385 = vpop.f32.mrb[0].mxu0
    %386 = vdwg.mxu0
    %v387 = vmul.f32 %v379, 0.01
    %v388 = vmul.f32 %v384, 0.01
    %v389 = vmax.f32 %v379, %v387
    %v390 = vmax.f32 %v384, %v388
    %s391 = scalar_lea.vmem [#allocation2], 64
    %v392 = vld [vmem:[%s391] sm:$0xff]
    %v393 = vld [vmem:[%s391 + $0x8] sm:$0xff]
    %v394 = vld [vmem:[%s391 + $0x10] sm:$0xff]
    %v395 = vld [vmem:[%s391 + $0x18] sm:$0xff]
    %s396 = scalar_lea.vmem %s3, 2
    %v397 = vld [vmem:[%s396] sm:$0x1]
    %398 = vmatprep.subr.mxu0 0.0
    %399 = vmatpush1.msra.mxu0 %v389
    %400 = vmatprep.subr.mxu0 0.0
    %401 = vmatpush1.msra.mxu0 %v390
    %402 = vmatprep.subr.mxu0 0.0
    %403 = vmatpush1.msra.mxu0 0.0
    %404 = vmatprep.subr.mxu0 0.0
    %405 = vmatpush1.msra.mxu0 0.0
    %406 = vmatprep.subr.mxu0 0.0
    %407 = vmatpush1.msra.mxu0 0.0
    %408 = vmatprep.subr.mxu0 0.0
    %409 = vmatpush1.msra.mxu0 0.0
    %410 = vmatprep.subr.mxu0 0.0
    %411 = vmatpush1.msra.mxu0 0.0
    %412 = vmatprep.subr.mxu0 0.0
    %413 = vmatpush1.msra.mxu0 0.0
    %414 = vmatprep.subr.mxu0 0.0
    %415 = vmatpush1.msra.mxu0 0.0
    %416 = vmatprep.subr.mxu0 0.0
    %417 = vmatpush1.msra.mxu0 0.0
    %418 = vmatprep.subr.mxu0 0.0
    %419 = vmatpush1.msra.mxu0 0.0
    %420 = vmatprep.subr.mxu0 0.0
    %421 = vmatpush1.msra.mxu0 0.0
    %422 = vmatprep.subr.mxu0 0.0
    %423 = vmatpush1.msra.mxu0 0.0
    %424 = vmatprep.subr.mxu0 0.0
    %425 = vmatpush1.msra.mxu0 0.0
    %426 = vmatprep.subr.mxu0 0.0
    %427 = vmatpush1.msra.mxu0 0.0
    %428 = vmatprep.subr.mxu0 0.0
    %429 = vmatpush1.msra.mxu0 0.0
    %430 = vmatprep.subr.mxu0 0.0
    %431 = vmatpush1.msra.mxu0 0.0
    %432 = vmatprep.subr.mxu0 0.0
    %433 = vmatpush1.msra.mxu0 0.0
    %434 = vmatprep.subr.mxu0 0.0
    %435 = vmatpush1.msra.mxu0 0.0
    %436 = vmatprep.subr.mxu0 0.0
    %437 = vmatpush1.msra.mxu0 0.0
    %438 = vmatprep.subr.mxu0 0.0
    %439 = vmatpush1.msra.mxu0 0.0
    %440 = vmatprep.subr.mxu0 0.0
    %441 = vmatpush1.msra.mxu0 0.0
    %442 = vmatprep.subr.mxu0 0.0
    %443 = vmatpush1.msra.mxu0 0.0
    %444 = vmatprep.subr.mxu0 0.0
    %445 = vmatpush1.msra.mxu0 0.0
    %446 = vmatprep.subr.mxu0 0.0
    %447 = vmatpush1.msra.mxu0 0.0
    %448 = vmatprep.subr.mxu0 0.0
    %449 = vmatpush1.msra.mxu0 0.0
    %450 = vmatprep.subr.mxu0 0.0
    %451 = vmatpush1.msra.mxu0 0.0
    %452 = vmatprep.subr.mxu0 0.0
    %453 = vmatpush1.msra.mxu0 0.0
    %454 = vmatprep.subr.mxu0 0.0
    %455 = vmatpush1.msra.mxu0 0.0
    %456 = vmatprep.subr.mxu0 0.0
    %457 = vmatpush1.msra.mxu0 0.0
    %458 = vmatprep.subr.mxu0 0.0
    %459 = vmatpush1.msra.mxu0 0.0
    %460 = vmatprep.subr.mxu0 0.0
    %461 = vmatpush1.msra.mxu0 0.0
    %462 = vmatprep.mubr.f32.mxu0 0.0
    %463 = vmatmul.mubr.f32.gmra.mrb[0].mxu0 %v46
    %v464 = vpop.f32.mrb[0].mxu0
    %v465 = vadd.f32 0.0, %v464
    %v466 = vpop.f32.mrb[0].mxu0
    %467 = vmatprep.mubr.f32.mxu0 0.0
    %468 = vmatmul.mubr.f32.gmra.mrb[0].mxu0 %v49
    %v469 = vpop.f32.mrb[0].mxu0
    %v470 = vadd.f32 0.0, %v469
    %v471 = vpop.f32.mrb[0].mxu0
    %472 = vdwg.mxu0
    %v474 = vlaneseq
    %v475 = vshrl.u32 %v474, 7
    %v476 = vsub.s32 0, %v475
    %v477 = vrot.slane %v397, %v476
    %v480 = vsel %vm132, %v465, 0
    %v483 = vsel %vm132, %v470, 0
    %485 = vmatprep.subr.mxu0 0.0
    %486 = vmatpush1.msra.mxu0 %v392
    %487 = vmatprep.subr.mxu0 0.0
    %488 = vmatpush1.msra.mxu0 %v393
    %489 = vmatprep.subr.mxu0 0.0
    %490 = vmatpush1.msra.mxu0 %v394
    %491 = vmatprep.subr.mxu0 0.0
    %492 = vmatpush1.msra.mxu0 %v395
    %493 = vmatprep.subr.mxu0 0.0
    %494 = vmatpush1.msra.mxu0 0.0
    %495 = vmatprep.subr.mxu0 0.0
    %496 = vmatpush1.msra.mxu0 0.0
    %497 = vmatprep.subr.mxu0 0.0
    %498 = vmatpush1.msra.mxu0 0.0
    %499 = vmatprep.subr.mxu0 0.0
    %500 = vmatpush1.msra.mxu0 0.0
    %501 = vmatprep.subr.mxu0 0.0
    %502 = vmatpush1.msra.mxu0 0.0
    %503 = vmatprep.subr.mxu0 0.0
    %504 = vmatpush1.msra.mxu0 0.0
    %505 = vmatprep.subr.mxu0 0.0
    %506 = vmatpush1.msra.mxu0 0.0
    %507 = vmatprep.subr.mxu0 0.0
    %508 = vmatpush1.msra.mxu0 0.0
    %509 = vmatprep.subr.mxu0 0.0
    %510 = vmatpush1.msra.mxu0 0.0
    %511 = vmatprep.subr.mxu0 0.0
    %512 = vmatpush1.msra.mxu0 0.0
    %513 = vmatprep.subr.mxu0 0.0
    %514 = vmatpush1.msra.mxu0 0.0
    %515 = vmatprep.subr.mxu0 0.0
    %516 = vmatpush1.msra.mxu0 0.0
    %517 = vmatprep.subr.mxu0 0.0
    %518 = vmatpush1.msra.mxu0 0.0
    %519 = vmatprep.subr.mxu0 0.0
    %520 = vmatpush1.msra.mxu0 0.0
    %521 = vmatprep.subr.mxu0 0.0
    %522 = vmatpush1.msra.mxu0 0.0
    %523 = vmatprep.subr.mxu0 0.0
    %524 = vmatpush1.msra.mxu0 0.0
    %525 = vmatprep.subr.mxu0 0.0
    %526 = vmatpush1.msra.mxu0 0.0
    %527 = vmatprep.subr.mxu0 0.0
    %528 = vmatpush1.msra.mxu0 0.0
    %529 = vmatprep.subr.mxu0 0.0
    %530 = vmatpush1.msra.mxu0 0.0
    %531 = vmatprep.subr.mxu0 0.0
    %532 = vmatpush1.msra.mxu0 0.0
    %533 = vmatprep.subr.mxu0 0.0
    %534 = vmatpush1.msra.mxu0 0.0
    %535 = vmatprep.subr.mxu0 0.0
    %536 = vmatpush1.msra.mxu0 0.0
    %537 = vmatprep.subr.mxu0 0.0
    %538 = vmatpush1.msra.mxu0 0.0
    %539 = vmatprep.subr.mxu0 0.0
    %540 = vmatpush1.msra.mxu0 0.0
    %541 = vmatprep.subr.mxu0 0.0
    %542 = vmatpush1.msra.mxu0 0.0
    %543 = vmatprep.subr.mxu0 0.0
    %544 = vmatpush1.msra.mxu0 0.0
    %545 = vmatprep.subr.mxu0 0.0
    %546 = vmatpush1.msra.mxu0 0.0
    %547 = vmatprep.subr.mxu0 0.0
    %548 = vmatpush1.msra.mxu0 0.0
    %549 = vmatprep.mubr.f32.mxu0 0.0
    %550 = vmatmul.mubr.f32.gmra.mrb[0].mxu0 %v480
    %v551 = vpop.f32.mrb[0].mxu0
    %v552 = vadd.f32 %v477, %v551
    %v553 = vpop.f32.mrb[0].mxu0
    %554 = vmatprep.mubr.f32.mxu0 0.0
    %555 = vmatmul.mubr.f32.gmra.mrb[0].mxu0 %v483
    %v556 = vpop.f32.mrb[0].mxu0
    %v557 = vadd.f32 %v477, %v556
    %v558 = vpop.f32.mrb[0].mxu0
    %559 = vdwg.mxu0
    %v560 = vld [vmem:[%s4] sm:$0xff]
    %v561 = vld [vmem:[%s4 + $0x8] sm:$0xff]
    %v562 = vld [vmem:[%s4 + $0x10] sm:$0xff]
    %v563 = vld [vmem:[%s4 + $0x18] sm:$0xff]
    %v564 = vld [vmem:[%s4 + $0x20] sm:$0x1]
    %v565 = vlaneseq
    %v566 = vshrl.u32 %v565, 7
    %v567 = vsub.s32 0, %v566
    %v568 = vrot.slane %v564, %v567
    %v570 = vsel %vm132, %v552, 0
    %v573 = vsel %vm132, %v557, 0
    %575 = vmatprep.subr.mxu0 0.0
    %576 = vmatpush1.msra.mxu0 %v560
    %577 = vmatprep.subr.mxu0 0.0
    %578 = vmatpush1.msra.mxu0 %v561
    %579 = vmatprep.subr.mxu0 0.0
    %580 = vmatpush1.msra.mxu0 %v562
    %581 = vmatprep.subr.mxu0 0.0
    %582 = vmatpush1.msra.mxu0 %v563
    %583 = vmatprep.subr.mxu0 0.0
    %584 = vmatpush1.msra.mxu0 0.0
    %585 = vmatprep.subr.mxu0 0.0
    %586 = vmatpush1.msra.mxu0 0.0
    %587 = vmatprep.subr.mxu0 0.0
    %588 = vmatpush1.msra.mxu0 0.0
    %589 = vmatprep.subr.mxu0 0.0
    %590 = vmatpush1.msra.mxu0 0.0
    %591 = vmatprep.subr.mxu0 0.0
    %592 = vmatpush1.msra.mxu0 0.0
    %593 = vmatprep.subr.mxu0 0.0
    %594 = vmatpush1.msra.mxu0 0.0
    %595 = vmatprep.subr.mxu0 0.0
    %596 = vmatpush1.msra.mxu0 0.0
    %597 = vmatprep.subr.mxu0 0.0
    %598 = vmatpush1.msra.mxu0 0.0
    %599 = vmatprep.subr.mxu0 0.0
    %600 = vmatpush1.msra.mxu0 0.0
    %601 = vmatprep.subr.mxu0 0.0
    %602 = vmatpush1.msra.mxu0 0.0
    %603 = vmatprep.subr.mxu0 0.0
    %604 = vmatpush1.msra.mxu0 0.0
    %605 = vmatprep.subr.mxu0 0.0
    %606 = vmatpush1.msra.mxu0 0.0
    %607 = vmatprep.subr.mxu0 0.0
    %608 = vmatpush1.msra.mxu0 0.0
    %609 = vmatprep.subr.mxu0 0.0
    %610 = vmatpush1.msra.mxu0 0.0
    %611 = vmatprep.subr.mxu0 0.0
    %612 = vmatpush1.msra.mxu0 0.0
    %613 = vmatprep.subr.mxu0 0.0
    %614 = vmatpush1.msra.mxu0 0.0
    %615 = vmatprep.subr.mxu0 0.0
    %616 = vmatpush1.msra.mxu0 0.0
    %617 = vmatprep.subr.mxu0 0.0
    %618 = vmatpush1.msra.mxu0 0.0
    %619 = vmatprep.subr.mxu0 0.0
    %620 = vmatpush1.msra.mxu0 0.0
    %621 = vmatprep.subr.mxu0 0.0
    %622 = vmatpush1.msra.mxu0 0.0
    %623 = vmatprep.subr.mxu0 0.0
    %624 = vmatpush1.msra.mxu0 0.0
    %625 = vmatprep.subr.mxu0 0.0
    %626 = vmatpush1.msra.mxu0 0.0
    %627 = vmatprep.subr.mxu0 0.0
    %628 = vmatpush1.msra.mxu0 0.0
    %629 = vmatprep.subr.mxu0 0.0
    %630 = vmatpush1.msra.mxu0 0.0
    %631 = vmatprep.subr.mxu0 0.0
    %632 = vmatpush1.msra.mxu0 0.0
    %633 = vmatprep.subr.mxu0 0.0
    %634 = vmatpush1.msra.mxu0 0.0
    %635 = vmatprep.subr.mxu0 0.0
    %636 = vmatpush1.msra.mxu0 0.0
    %637 = vmatprep.subr.mxu0 0.0
    %638 = vmatpush1.msra.mxu0 0.0
    %639 = vmatprep.mubr.f32.mxu0 0.0
    %640 = vmatmul.mubr.f32.gmra.mrb[0].mxu0 %v570
    %v641 = vpop.f32.mrb[0].mxu0
    %v642 = vadd.f32 %v568, %v641
    %v643 = vpop.f32.mrb[0].mxu0
    %644 = vmatprep.mubr.f32.mxu0 0.0
    %645 = vmatmul.mubr.f32.gmra.mrb[0].mxu0 %v573
    %v646 = vpop.f32.mrb[0].mxu0
    %v647 = vadd.f32 %v568, %v646
    %v648 = vpop.f32.mrb[0].mxu0
    %649 = vdwg.mxu0
    %v650 = vmul.f32 %v642, 0.5
    %v651 = vmul.f32 %v647, 0.5
    %v652 = vtanh.pop %v650
    %v653 = vtanh.pop %v651
    %v654 = vmul.f32 %v652, 0.5
    %v655 = vmul.f32 %v653, 0.5
    %v656 = vadd.f32 %v654, 0.5
    %v657 = vadd.f32 %v655, 0.5
    %658 = vst.msk [vmem:[#allocation5] sm:$0xff] %vm44, %v552
    %659 = vst.msk [vmem:[#allocation5 + $0x8] sm:$0xff] %vm44, %v557
    %662 = vrot.lane.b32.xlu0 %v642, 16
    %v663 = vpop.permute.xlu0 %662
    %664 = vrot.lane.b32.xlu0 %v647, 16
    %v665 = vpop.permute.xlu0 %664
    %vm668 = vcmask 162944
    %669 = vst.msk [vmem:[#allocation5] sm:$0xff] %vm668, %v663
    %670 = vst.msk [vmem:[#allocation5 + $0x8] sm:$0xff] %vm668, %v665
    %673 = vrot.lane.b32.xlu0 %v656, 20
    %v674 = vpop.permute.xlu0 %673
    %675 = vrot.lane.b32.xlu0 %v657, 20
    %v676 = vpop.permute.xlu0 %675
    %vm679 = vcmask 195744
    %680 = vst.msk [vmem:[#allocation5] sm:$0xff] %vm679, %v674
    %681 = vst.msk [vmem:[#allocation5 + $0x8] sm:$0xff] %vm679, %v676
    // Predicated region
    $region26: #{tpu_custom_call.1} parent=1 // pred_check
      _
    $region27: #{tpu_custom_call.1} parent=1 // pred_check_branch
      %683 = sbr.rel (0) target = $region29
    $region28: #{tpu_custom_call.1} parent=1 // pred_region
      %s685 = ssub.s32 256, 256
      %686 = vsyncadd [#allocation4], %s685
      %s687 = sshll.u32 [#allocation5], 4
      %s688 = int_to_ptr.vmem [resolvable:$true] %s687
      %693 = dma.vmem_to_hbm [thread:$0]  %s688, 256, %s5, [#allocation4], 128, 128, 8
    $region29: #{tpu_custom_call.1} parent=1 // pred_fallthru
      _
    // Predicated region
    $region30: #{tpu_custom_call.1} parent=1 // pred_check
      _
    $region31: #{tpu_custom_call.1} parent=1 // pred_check_branch
      %695 = sbr.rel (0) target = $region33
    $region32: #{tpu_custom_call.1} parent=1 // pred_region
      %696 = dma.done [#allocation4], 256
    $region33: #{tpu_custom_call.1} parent=1 // pred_fallthru
      _
    %697 = vsyncpa [#allocation3], 1
    %698 = vsyncpa [#allocation4], 1

</llo_original>
